<compile_context>
chip_gen: v7x
topology: tpu7x:2x2x1
jax: 0.10.0
libtpu: 0.0.40
codegen_flags: <defaults>
</compile_context>

<pallas_src>
import jax
import jax.numpy as jnp
from jax import lax
from jax.experimental import pallas as pl
from jax.experimental.pallas import tpu as pltpu

NEG_SLOPE = 0.01       # default negative_slope of torch.nn.functional.leaky_relu
SUBLANE = 16           # bf16 packs 2 rows/sublane -> batch tile multiple of 16


def _leaky_relu(v):
    # max(v, a*v) == leaky_relu(v) for 0 < a < 1; one VALU op vs cmp+select.
    return jnp.maximum(v, NEG_SLOPE * v)


def _round_up(n, m):
    return ((n + m - 1) // m) * m


def mlp_backbone_kernel(x_ref, w1_ref, b1_ref, w2_ref, b2_ref,
                        w3_ref, b3_ref, w4_ref, b4_ref, o_ref):
    """One batch tile: x_ref (tb, D) f32 -> o_ref (1, 1, tb) f32.

    w1..w3 are (in, out) in the compute dtype (bf16); biases are f32 (1, out).
    w4 is passed pre-transposed as an f32 (1, H) row; fc4 is an f32 "nt" dot
    contracting H so the result is already lane-dense (1, tb).
    """
    compute_dtype = w1_ref.dtype

    # In-kernel f32 -> bf16 cast (VPU work hidden under the x DMA / MXU).
    x = x_ref[...].astype(compute_dtype)

    # fc1..fc3: MXU matmuls with f32 accumulation; bias + leaky_relu in f32.
    h = _leaky_relu(
        jnp.dot(x, w1_ref[...], preferred_element_type=jnp.float32) + b1_ref[...])
    h = _leaky_relu(
        jnp.dot(h.astype(compute_dtype), w2_ref[...],
                preferred_element_type=jnp.float32) + b2_ref[...])
    h = _leaky_relu(
        jnp.dot(h.astype(compute_dtype), w3_ref[...],
                preferred_element_type=jnp.float32) + b3_ref[...])

    # fc4: (1, H) . (tb, H)^T -> (1, tb), f32, contracting H on both sides.
    # Lane-dense store (unmasked vst) instead of a (tb, 1) column.
    out_row = lax.dot_general(
        w4_ref[...], h, (((1,), (1,)), ((), ())),
        preferred_element_type=jnp.float32) + b4_ref[...]
    o_ref[0] = out_row.astype(o_ref.dtype)


def mlp_backbone(x, params, *, compute_dtype=jnp.bfloat16, block_b=512,
                 x_buffers=2):
    """x: (B, *input_shape) float32.  Returns (B, 1) float32.

    x_buffers: x-pipeline depth; 2 is the default, 3 helps on v5e (lower HBM BW).
    """
    B = x.shape[0]
    x_flat = x.reshape(B, -1)            # torch.flatten(x, start_dim=1); stays f32
    D = x_flat.shape[1]
    w1, b1, w2, b2, w3, b3, w4, b4 = params
    H = w1.shape[1]

    # Weights for fc1-fc3 in bf16 (tiny, one-time); epilogue operands stay f32.
    w1c = w1.astype(compute_dtype)
    w2c = w2.astype(compute_dtype)
    w3c = w3.astype(compute_dtype)
    w4_row = w4.reshape(1, H).astype(jnp.float32)
    b4_2d = b4.reshape(1, 1).astype(jnp.float32)

    # Pad only to the 16-row packed-sublane multiple (not to a tile multiple).
    padded_b = _round_up(B, SUBLANE)
    if padded_b != B:
        x_flat = jnp.pad(x_flat, ((0, padded_b - B), (0, 0)))

    # VMEM guard for the (tb, D) f32 x block (multi-buffered).
    x_vmem_budget = 24 * 1024 * 1024
    max_tb = max(SUBLANE,
                 (x_vmem_budget // (max(x_buffers, 2) * D * 4)) // SUBLANE * SUBLANE)

    tb = min(_round_up(block_b, SUBLANE), padded_b, max_tb)
    # v7x megacore: make sure the batch-parallel grid has >= 2 steps.
    if padded_b > SUBLANE and pl.cdiv(padded_b, tb) < 2:
        tb = _round_up(pl.cdiv(padded_b, 2), SUBLANE)
        tb = max(SUBLANE, min(tb, max_tb))
    num_tiles = pl.cdiv(padded_b, tb)    # last block may be partial (masked)

    if x_buffers is not None and x_buffers > 2:
        x_spec = pl.BlockSpec((tb, D), lambda i: (i, 0),
                              pipeline_mode=pl.Buffered(x_buffers))
    else:
        x_spec = pl.BlockSpec((tb, D), lambda i: (i, 0))

    in_specs = [
        x_spec,                                         # x: tiled over batch
        pl.BlockSpec(w1c.shape, lambda i: (0, 0)),      # weights/biases stay
        pl.BlockSpec(b1.shape, lambda i: (0, 0)),       # resident across the
        pl.BlockSpec(w2c.shape, lambda i: (0, 0)),      # whole grid (constant
        pl.BlockSpec(b2.shape, lambda i: (0, 0)),       # block index => no
        pl.BlockSpec(w3c.shape, lambda i: (0, 0)),      # re-DMA per tile).
        pl.BlockSpec(b3.shape, lambda i: (0, 0)),
        pl.BlockSpec(w4_row.shape, lambda i: (0, 0)),
        pl.BlockSpec(b4_2d.shape, lambda i: (0, 0)),
    ]
    # Lane-dense output: one (1, tb) row per grid step.
    out_specs = pl.BlockSpec((1, 1, tb), lambda i: (i, 0, 0))
    out_shape = jax.ShapeDtypeStruct((num_tiles, 1, tb), jnp.float32)

    out = pl.pallas_call(
        mlp_backbone_kernel,
        out_shape=out_shape,
        grid=(num_tiles,),
        in_specs=in_specs,
        out_specs=out_specs,
        compiler_params=pltpu.CompilerParams(
            dimension_semantics=("parallel",),
            vmem_limit_bytes=32 * 1024 * 1024),
    )(x_flat, w1c, b1, w2c, b2, w3c, b3, w4_row, b4_2d)

    return out.reshape(-1)[:B].reshape(B, 1)


def init_params(key, in_features, hidden_size):
    """Deterministic synthetic parameters (PyTorch nn.Linear-style init).

    Weights are stored (in, out) so the kernel computes x @ W + b, matching
    PyTorch's x @ W.T + b with W of shape (out, in).
    """
    dims = [(in_features, hidden_size),
            (hidden_size, hidden_size),
            (hidden_size, hidden_size),
            (hidden_size, 1)]
    params = []
    for fan_in, fan_out in dims:
        kw, kb, key = jax.random.split(key, 3)
        bound = 1.0 / jnp.sqrt(fan_in)
        w = jax.random.uniform(kw, (fan_in, fan_out), jnp.float32, -bound, bound)
        b = jax.random.uniform(kb, (1, fan_out), jnp.float32, -bound, bound)
        params.extend([w, b])
    return tuple(params)


def reference_forward(x, params, compute_dtype=jnp.float32):
    """Pure-JAX reference matching the PyTorch forward (optionally mirroring
    the kernel's bf16 matmul inputs with f32 accumulation; fc4 stays f32)."""
    w1, b1, w2, b2, w3, b3, w4, b4 = params
    h = x.reshape(x.shape[0], -1).astype(compute_dtype)
    h = jax.nn.leaky_relu(
        jnp.dot(h, w1.astype(compute_dtype),
                preferred_element_type=jnp.float32) + b1, NEG_SLOPE)
    h = jax.nn.leaky_relu(
        jnp.dot(h.astype(compute_dtype), w2.astype(compute_dtype),
                preferred_element_type=jnp.float32) + b2, NEG_SLOPE)
    h = jax.nn.leaky_relu(
        jnp.dot(h.astype(compute_dtype), w3.astype(compute_dtype),
                preferred_element_type=jnp.float32) + b3, NEG_SLOPE)
    return jnp.dot(h, w4.astype(jnp.float32),
                   preferred_element_type=jnp.float32) + b4


if __name__ == "__main__":
    key = jax.random.PRNGKey(0)
    k_x, k_p, k_x2 = jax.random.split(key, 3)

    # input_shape = (4, 16, 16) -> D = 1024, hidden_size = 32, batch = 2
    B, C, Hs, Ws = 2, 4, 16, 16
    hidden_size = 32
    D = C * Hs * Ws

    x = jax.random.normal(k_x, (B, C, Hs, Ws), jnp.float32)
    params = init_params(k_p, D, hidden_size)

    out = jax.block_until_ready(mlp_backbone(x, params))
    assert out.shape == (B, 1), out.shape

    # Tight check against a reference that mirrors the kernel's bf16 matmul
    # inputs, plus a loose sanity check against the full-f32 reference.
    ref_bf16 = reference_forward(x, params, compute_dtype=jnp.bfloat16)
    ref_f32 = reference_forward(x, params, compute_dtype=jnp.float32)
    assert jnp.allclose(out, ref_bf16, atol=2e-3, rtol=2e-3), (out, ref_bf16)
    assert jnp.allclose(out, ref_f32, atol=1e-1, rtol=1e-1), (out, ref_f32)

    # Ragged batch (not a multiple of the tile): exercises the cdiv grid with a
    # partial last x block and the >=2-step split for v7x megacore.
    B2 = 40
    x2 = jax.random.normal(k_x2, (B2, C, Hs, Ws), jnp.float32)
    out2 = jax.block_until_ready(mlp_backbone(x2, params))
    assert out2.shape == (B2, 1), out2.shape
    ref2 = reference_forward(x2, params, compute_dtype=jnp.bfloat16)
    assert jnp.allclose(out2, ref2, atol=2e-3, rtol=2e-3), (out2, ref2)

    print("KERNEL_OK")
</pallas_src>

<mosaic_0001>
module attributes {stable_mosaic.version = 11 : i64} {
  func.func @mlp_backbone_kernel(%arg0: i32, %arg1: memref<16x1024xf32, #tpu.memory_space<vmem>>, %arg2: memref<1024x32xbf16, #tpu.memory_space<vmem>>, %arg3: memref<1x32xf32, #tpu.memory_space<vmem>>, %arg4: memref<32x32xbf16, #tpu.memory_space<vmem>>, %arg5: memref<1x32xf32, #tpu.memory_space<vmem>>, %arg6: memref<32x32xbf16, #tpu.memory_space<vmem>>, %arg7: memref<1x32xf32, #tpu.memory_space<vmem>>, %arg8: memref<1x32xf32, #tpu.memory_space<vmem>>, %arg9: memref<1x1xf32, #tpu.memory_space<vmem>>, %arg10: memref<1x1x16xf32, #tpu.memory_space<vmem>>) attributes {dimension_semantics = [#tpu.dimension_semantics<parallel>], iteration_bounds = array<i64: 1>, scalar_prefetch = 0 : i64, scratch_operands = 0 : i64, tpu.core_type = #tpu.core_type<tc>, window_params = [{transform_indices = @transform_0, window_bounds = array<i64: 16, 1024>}, {pipeline_mode = #tpu.pipeline_mode<synchronous>, transform_indices = @transform_1, window_bounds = array<i64: 1024, 32>}, {pipeline_mode = #tpu.pipeline_mode<synchronous>, transform_indices = @transform_2, window_bounds = array<i64: 1, 32>}, {pipeline_mode = #tpu.pipeline_mode<synchronous>, transform_indices = @transform_3, window_bounds = array<i64: 32, 32>}, {pipeline_mode = #tpu.pipeline_mode<synchronous>, transform_indices = @transform_4, window_bounds = array<i64: 1, 32>}, {pipeline_mode = #tpu.pipeline_mode<synchronous>, transform_indices = @transform_5, window_bounds = array<i64: 32, 32>}, {pipeline_mode = #tpu.pipeline_mode<synchronous>, transform_indices = @transform_6, window_bounds = array<i64: 1, 32>}, {pipeline_mode = #tpu.pipeline_mode<synchronous>, transform_indices = @transform_7, window_bounds = array<i64: 1, 32>}, {pipeline_mode = #tpu.pipeline_mode<synchronous>, transform_indices = @transform_8, window_bounds = array<i64: 1, 1>}, {transform_indices = @transform_9, window_bounds = array<i64: 1, 1, 16>}]} {
    %c0 = arith.constant 0 : index
    %c0_0 = arith.constant 0 : index
    %0 = vector.load %arg1[%c0, %c0_0] : memref<16x1024xf32, #tpu.memory_space<vmem>>, vector<16x1024xf32>
    %1 = arith.truncf %0 : vector<16x1024xf32> to vector<16x1024xbf16>
    %c0_1 = arith.constant 0 : index
    %c0_2 = arith.constant 0 : index
    %2 = vector.load %arg2[%c0_1, %c0_2] : memref<1024x32xbf16, #tpu.memory_space<vmem>>, vector<1024x32xbf16>
    %cst = arith.constant dense<0.000000e+00> : vector<16x32xf32>
    %3 = tpu.matmul %1, %2, %cst {dimension_numbers = #tpu.dot_dimension_numbers<[1], [0], [0], [1], [0, 0, 1, 1], [], []>} : vector<16x1024xbf16>, vector<1024x32xbf16>, vector<16x32xf32> -> vector<16x32xf32>
    %c0_3 = arith.constant 0 : index
    %c0_4 = arith.constant 0 : index
    %4 = vector.load %arg3[%c0_3, %c0_4] : memref<1x32xf32, #tpu.memory_space<vmem>>, vector<1x32xf32>
    %5 = vector.broadcast %4 : vector<1x32xf32> to vector<16x32xf32>
    %6 = arith.addf %3, %5 : vector<16x32xf32>
    %cst_5 = arith.constant 0.00999999977 : f32
    %7 = vector.broadcast %cst_5 : f32 to vector<16x32xf32>
    %8 = arith.mulf %7, %6 : vector<16x32xf32>
    %9 = arith.maximumf %6, %8 : vector<16x32xf32>
    %10 = arith.truncf %9 : vector<16x32xf32> to vector<16x32xbf16>
    %c0_6 = arith.constant 0 : index
    %c0_7 = arith.constant 0 : index
    %11 = vector.load %arg4[%c0_6, %c0_7] : memref<32x32xbf16, #tpu.memory_space<vmem>>, vector<32x32xbf16>
    %cst_8 = arith.constant dense<0.000000e+00> : vector<16x32xf32>
    %12 = tpu.matmul %10, %11, %cst_8 {dimension_numbers = #tpu.dot_dimension_numbers<[1], [0], [0], [1], [0, 0, 1, 1], [], []>} : vector<16x32xbf16>, vector<32x32xbf16>, vector<16x32xf32> -> vector<16x32xf32>
    %c0_9 = arith.constant 0 : index
    %c0_10 = arith.constant 0 : index
    %13 = vector.load %arg5[%c0_9, %c0_10] : memref<1x32xf32, #tpu.memory_space<vmem>>, vector<1x32xf32>
    %14 = vector.broadcast %13 : vector<1x32xf32> to vector<16x32xf32>
    %15 = arith.addf %12, %14 : vector<16x32xf32>
    %cst_11 = arith.constant 0.00999999977 : f32
    %16 = vector.broadcast %cst_11 : f32 to vector<16x32xf32>
    %17 = arith.mulf %16, %15 : vector<16x32xf32>
    %18 = arith.maximumf %15, %17 : vector<16x32xf32>
    %19 = arith.truncf %18 : vector<16x32xf32> to vector<16x32xbf16>
    %c0_12 = arith.constant 0 : index
    %c0_13 = arith.constant 0 : index
    %20 = vector.load %arg6[%c0_12, %c0_13] : memref<32x32xbf16, #tpu.memory_space<vmem>>, vector<32x32xbf16>
    %cst_14 = arith.constant dense<0.000000e+00> : vector<16x32xf32>
    %21 = tpu.matmul %19, %20, %cst_14 {dimension_numbers = #tpu.dot_dimension_numbers<[1], [0], [0], [1], [0, 0, 1, 1], [], []>} : vector<16x32xbf16>, vector<32x32xbf16>, vector<16x32xf32> -> vector<16x32xf32>
    %c0_15 = arith.constant 0 : index
    %c0_16 = arith.constant 0 : index
    %22 = vector.load %arg7[%c0_15, %c0_16] : memref<1x32xf32, #tpu.memory_space<vmem>>, vector<1x32xf32>
    %23 = vector.broadcast %22 : vector<1x32xf32> to vector<16x32xf32>
    %24 = arith.addf %21, %23 : vector<16x32xf32>
    %cst_17 = arith.constant 0.00999999977 : f32
    %25 = vector.broadcast %cst_17 : f32 to vector<16x32xf32>
    %26 = arith.mulf %25, %24 : vector<16x32xf32>
    %27 = arith.maximumf %24, %26 : vector<16x32xf32>
    %c0_18 = arith.constant 0 : index
    %c0_19 = arith.constant 0 : index
    %28 = vector.load %arg8[%c0_18, %c0_19] : memref<1x32xf32, #tpu.memory_space<vmem>>, vector<1x32xf32>
    %cst_20 = arith.constant dense<0.000000e+00> : vector<1x16xf32>
    %29 = tpu.matmul %28, %27, %cst_20 {dimension_numbers = #tpu.dot_dimension_numbers<[1], [1], [0], [0], [0, 0, 1, 0], [], []>} : vector<1x32xf32>, vector<16x32xf32>, vector<1x16xf32> -> vector<1x16xf32>
    %c0_21 = arith.constant 0 : index
    %c0_22 = arith.constant 0 : index
    %30 = vector.load %arg9[%c0_21, %c0_22] : memref<1x1xf32, #tpu.memory_space<vmem>>, vector<1x1xf32>
    %31 = vector.broadcast %30 : vector<1x1xf32> to vector<1x16xf32>
    %32 = arith.addf %29, %31 : vector<1x16xf32>
    %c0_23 = arith.constant 0 : index
    %c0_24 = arith.constant 0 : index
    %c0_25 = arith.constant 0 : index
    %33 = vector.load %arg10[%c0_23, %c0_24, %c0_25] : memref<1x1x16xf32, #tpu.memory_space<vmem>>, vector<1x1x16xf32>
    %34 = vector.shape_cast %33 : vector<1x1x16xf32> to vector<1x16xf32>
    %35 = vector.shape_cast %32 : vector<1x16xf32> to vector<1x1x16xf32>
    tpu.vector_store %arg10[%c0_23, %c0_24, %c0_25], %35 {strides = array<i32>} : memref<1x1x16xf32, #tpu.memory_space<vmem>>, vector<1x1x16xf32>,
    return
  }
  func.func @transform_0(%arg0: i32) -> (i32, i32) {
    %c0_i32 = arith.constant 0 : i32
    %c0_i32_0 = arith.constant 0 : i32
    return %arg0, %c0_i32 : i32, i32
  }
  func.func @transform_1(%arg0: i32) -> (i32, i32) {
    %c0_i32 = arith.constant 0 : i32
    %c0_i32_0 = arith.constant 0 : i32
    %c0_i32_1 = arith.constant 0 : i32
    return %c0_i32, %c0_i32_0 : i32, i32
  }
  func.func @transform_2(%arg0: i32) -> (i32, i32) {
    %c0_i32 = arith.constant 0 : i32
    %c0_i32_0 = arith.constant 0 : i32
    %c0_i32_1 = arith.constant 0 : i32
    return %c0_i32, %c0_i32_0 : i32, i32
  }
  func.func @transform_3(%arg0: i32) -> (i32, i32) {
    %c0_i32 = arith.constant 0 : i32
    %c0_i32_0 = arith.constant 0 : i32
    %c0_i32_1 = arith.constant 0 : i32
    return %c0_i32, %c0_i32_0 : i32, i32
  }
  func.func @transform_4(%arg0: i32) -> (i32, i32) {
    %c0_i32 = arith.constant 0 : i32
    %c0_i32_0 = arith.constant 0 : i32
    %c0_i32_1 = arith.constant 0 : i32
    return %c0_i32, %c0_i32_0 : i32, i32
  }
  func.func @transform_5(%arg0: i32) -> (i32, i32) {
    %c0_i32 = arith.constant 0 : i32
    %c0_i32_0 = arith.constant 0 : i32
    %c0_i32_1 = arith.constant 0 : i32
    return %c0_i32, %c0_i32_0 : i32, i32
  }
  func.func @transform_6(%arg0: i32) -> (i32, i32) {
    %c0_i32 = arith.constant 0 : i32
    %c0_i32_0 = arith.constant 0 : i32
    %c0_i32_1 = arith.constant 0 : i32
    return %c0_i32, %c0_i32_0 : i32, i32
  }
  func.func @transform_7(%arg0: i32) -> (i32, i32) {
    %c0_i32 = arith.constant 0 : i32
    %c0_i32_0 = arith.constant 0 : i32
    %c0_i32_1 = arith.constant 0 : i32
    return %c0_i32, %c0_i32_0 : i32, i32
  }
  func.func @transform_8(%arg0: i32) -> (i32, i32) {
    %c0_i32 = arith.constant 0 : i32
    %c0_i32_0 = arith.constant 0 : i32
    %c0_i32_1 = arith.constant 0 : i32
    return %c0_i32, %c0_i32_0 : i32, i32
  }
  func.func @transform_9(%arg0: i32) -> (i32, i32, i32) {
    %c0_i32 = arith.constant 0 : i32
    %c0_i32_0 = arith.constant 0 : i32
    %c0_i32_1 = arith.constant 0 : i32
    return %arg0, %c0_i32, %c0_i32_0 : i32, i32, i32
  }
}

</mosaic_0001>

<llo_original>
// kernel: tpu_custom_call.1
$region0: #{tpu_custom_call.1}
  #allocation0 [shape = 'u32[]', space=smem, size = 0x4, offset = 0x4, fixed_abs, tag = 'smem constant byte address 0x4 - core index']
  #allocation1 [shape = 'u32[144,128]{1,0:T(1,128)}', space=vmem, size = 0x12000, scoped, tag = 'internal scratch']
  #allocation2 [shape = 'f32[1,1]{1,0:T(1,128)S(1)}', space=vmem, size = 0x200, scoped, tag = 'scoped memory for tpu_custom_call.1']
  %s0 = inlined_call_operand.vmem [shape: f32[16,1024], index: 0, kind: input, shape index: {}]
  %s1 = inlined_call_operand.vmem [shape: bf16[1024,32], index: 1, kind: input, shape index: {}]
  %s2 = inlined_call_operand.vmem [shape: f32[1,32], index: 2, kind: input, shape index: {}]
  %s3 = inlined_call_operand.vmem [shape: bf16[32,32], index: 3, kind: input, shape index: {}]
  %s4 = inlined_call_operand.vmem [shape: f32[1,32], index: 4, kind: input, shape index: {}]
  %s5 = inlined_call_operand.vmem [shape: bf16[32,32], index: 5, kind: input, shape index: {}]
  %s6 = inlined_call_operand.vmem [shape: f32[1,32], index: 6, kind: input, shape index: {}]
  %s7 = inlined_call_operand.vmem [shape: f32[1,32], index: 7, kind: input, shape index: {}]
  %s8 = inlined_call_operand.<no memory space> [shape: f32[1,1], index: 8, kind: input, shape index: {}]
  %s9 = inlined_call_operand.hbm [shape: f32[1,1,16], index: 9, kind: output, shape index: {}]
  %s10 = sld [smem:[#allocation0]]
  $region46: #{tpu_custom_call.1} parent=0
    _
  %s12 = ssub.s32 1, %s10
  %s13 = scalar_select 0, %s12, %s10
  %v14 = vstv %s8
  %15 = vst [vmem:[#allocation2] sm:$0x1] %v14
  $region1: #{tpu_custom_call.1} parent=0
    #allocation3 [shape = 'u8[512]{0}', space=vmem, size = 0x400, scoped, tag = 'output window, operand 0, single buffered']
    #allocation4 [shape = 's32[1]{0}', space=sflag, size = 0x4, scoped, tag = 'scoped memory for tpu_custom_call.1']
    %16 = vsyncpa [#allocation4], 0
    // Predicated region
    $region2: #{tpu_custom_call.1} parent=1 // pred_check
      _
    $region3: #{tpu_custom_call.1} parent=1 // pred_check_branch
      %18 = sbr.rel (0) target = $region5
    $region4: #{tpu_custom_call.1} parent=1 // pred_region
      _
    $region5: #{tpu_custom_call.1} parent=1 // pred_fallthru
      _
    // Predicated region
    $region6: #{tpu_custom_call.1} parent=1 // pred_check
      _
    $region7: #{tpu_custom_call.1} parent=1 // pred_check_branch
      %20 = sbr.rel (0) target = $region9
    $region8: #{tpu_custom_call.1} parent=1 // pred_region
      _
    $region9: #{tpu_custom_call.1} parent=1 // pred_fallthru
      _
    // Predicated region
    $region10: #{tpu_custom_call.1} parent=1 // pred_check
      _
    $region11: #{tpu_custom_call.1} parent=1 // pred_check_branch
      %22 = sbr.rel (0) target = $region13
    $region12: #{tpu_custom_call.1} parent=1 // pred_region
      _
    $region13: #{tpu_custom_call.1} parent=1 // pred_fallthru
      _
    // Predicated region
    $region14: #{tpu_custom_call.1} parent=1 // pred_check
      _
    $region15: #{tpu_custom_call.1} parent=1 // pred_check_branch
      %24 = sbr.rel (0) target = $region17
    $region16: #{tpu_custom_call.1} parent=1 // pred_region
      _
    $region17: #{tpu_custom_call.1} parent=1 // pred_fallthru
      _
    // Predicated region
    $region18: #{tpu_custom_call.1} parent=1 // pred_check
      _
    $region19: #{tpu_custom_call.1} parent=1 // pred_check_branch
      %26 = sbr.rel (0) target = $region21
    $region20: #{tpu_custom_call.1} parent=1 // pred_region
      _
    $region21: #{tpu_custom_call.1} parent=1 // pred_fallthru
      _
    // Predicated region
    $region22: #{tpu_custom_call.1} parent=1 // pred_check
      _
    $region23: #{tpu_custom_call.1} parent=1 // pred_check_branch
      %28 = sbr.rel (0) target = $region25
    $region24: #{tpu_custom_call.1} parent=1 // pred_region
      _
    $region25: #{tpu_custom_call.1} parent=1 // pred_fallthru
      _
    // Predicated region
    $region26: #{tpu_custom_call.1} parent=1 // pred_check
      _
    $region27: #{tpu_custom_call.1} parent=1 // pred_check_branch
      %30 = sbr.rel (0) target = $region29
    $region28: #{tpu_custom_call.1} parent=1 // pred_region
      _
    $region29: #{tpu_custom_call.1} parent=1 // pred_fallthru
      _
    // Predicated region
    $region30: #{tpu_custom_call.1} parent=1 // pred_check
      _
    $region31: #{tpu_custom_call.1} parent=1 // pred_check_branch
      %32 = sbr.rel (0) target = $region33
    $region32: #{tpu_custom_call.1} parent=1 // pred_region
      _
    $region33: #{tpu_custom_call.1} parent=1 // pred_fallthru
      _
    // Predicated region
    $region34: #{tpu_custom_call.1} parent=1 // pred_check
      _
    $region35: #{tpu_custom_call.1} parent=1 // pred_check_branch
      %34 = sbr.rel (0) target = $region37
    $region36: #{tpu_custom_call.1} parent=1 // pred_region
      _
    $region37: #{tpu_custom_call.1} parent=1 // pred_fallthru
      _
    %v36 = vld [vmem:[%s0] sm:$0xff]
    %v37 = vld [vmem:[%s0 + $0x8] sm:$0xff]
    %v38 = vld [vmem:[%s0 + $0x10] sm:$0xff]
    %v39 = vld [vmem:[%s0 + $0x18] sm:$0xff]
    %v40 = vld [vmem:[%s0 + $0x20] sm:$0xff]
    %v41 = vld [vmem:[%s0 + $0x28] sm:$0xff]
    %v42 = vld [vmem:[%s0 + $0x30] sm:$0xff]
    %v43 = vld [vmem:[%s0 + $0x38] sm:$0xff]
    %v44 = vld [vmem:[%s0 + $0x40] sm:$0xff]
    %v45 = vld [vmem:[%s0 + $0x48] sm:$0xff]
    %v46 = vld [vmem:[%s0 + $0x50] sm:$0xff]
    %v47 = vld [vmem:[%s0 + $0x58] sm:$0xff]
    %v48 = vld [vmem:[%s0 + $0x60] sm:$0xff]
    %v49 = vld [vmem:[%s0 + $0x68] sm:$0xff]
    %v50 = vld [vmem:[%s0 + $0x70] sm:$0xff]
    %v51 = vld [vmem:[%s0 + $0x78] sm:$0xff]
    %v52 = vpack.c.bf16 %v44, %v36
    %v53 = vpack.c.bf16 %v45, %v37
    %v54 = vpack.c.bf16 %v46, %v38
    %v55 = vpack.c.bf16 %v47, %v39
    %v56 = vpack.c.bf16 %v48, %v40
    %v57 = vpack.c.bf16 %v49, %v41
    %v58 = vpack.c.bf16 %v50, %v42
    %v59 = vpack.c.bf16 %v51, %v43
    %v60 = vld [vmem:[%s1] sm:$0xf]
    %v61 = vld [vmem:[%s1 + $0x4] sm:$0xf]
    %v62 = vld [vmem:[%s1 + $0x8] sm:$0xf]
    %v63 = vld [vmem:[%s1 + $0xc] sm:$0xf]
    %v64 = vld [vmem:[%s1 + $0x10] sm:$0xf]
    %v65 = vld [vmem:[%s1 + $0x14] sm:$0xf]
    %v66 = vld [vmem:[%s1 + $0x18] sm:$0xf]
    %v67 = vld [vmem:[%s1 + $0x1c] sm:$0xf]
    %v68 = vld [vmem:[%s1 + $0x20] sm:$0xf]
    %v69 = vld [vmem:[%s1 + $0x24] sm:$0xf]
    %v70 = vld [vmem:[%s1 + $0x28] sm:$0xf]
    %v71 = vld [vmem:[%s1 + $0x2c] sm:$0xf]
    %v72 = vld [vmem:[%s1 + $0x30] sm:$0xf]
    %v73 = vld [vmem:[%s1 + $0x34] sm:$0xf]
    %v74 = vld [vmem:[%s1 + $0x38] sm:$0xf]
    %v75 = vld [vmem:[%s1 + $0x3c] sm:$0xf]
    %v76 = vld [vmem:[%s1 + $0x40] sm:$0xf]
    %v77 = vld [vmem:[%s1 + $0x44] sm:$0xf]
    %v78 = vld [vmem:[%s1 + $0x48] sm:$0xf]
    %v79 = vld [vmem:[%s1 + $0x4c] sm:$0xf]
    %v80 = vld [vmem:[%s1 + $0x50] sm:$0xf]
    %v81 = vld [vmem:[%s1 + $0x54] sm:$0xf]
    %v82 = vld [vmem:[%s1 + $0x58] sm:$0xf]
    %v83 = vld [vmem:[%s1 + $0x5c] sm:$0xf]
    %v84 = vld [vmem:[%s1 + $0x60] sm:$0xf]
    %v85 = vld [vmem:[%s1 + $0x64] sm:$0xf]
    %v86 = vld [vmem:[%s1 + $0x68] sm:$0xf]
    %v87 = vld [vmem:[%s1 + $0x6c] sm:$0xf]
    %v88 = vld [vmem:[%s1 + $0x70] sm:$0xf]
    %v89 = vld [vmem:[%s1 + $0x74] sm:$0xf]
    %v90 = vld [vmem:[%s1 + $0x78] sm:$0xf]
    %v91 = vld [vmem:[%s1 + $0x7c] sm:$0xf]
    %v92 = vld [vmem:[%s1 + $0x80] sm:$0xf]
    %v93 = vld [vmem:[%s1 + $0x84] sm:$0xf]
    %v94 = vld [vmem:[%s1 + $0x88] sm:$0xf]
    %v95 = vld [vmem:[%s1 + $0x8c] sm:$0xf]
    %v96 = vld [vmem:[%s1 + $0x90] sm:$0xf]
    %v97 = vld [vmem:[%s1 + $0x94] sm:$0xf]
    %v98 = vld [vmem:[%s1 + $0x98] sm:$0xf]
    %v99 = vld [vmem:[%s1 + $0x9c] sm:$0xf]
    %v100 = vld [vmem:[%s1 + $0xa0] sm:$0xf]
    %v101 = vld [vmem:[%s1 + $0xa4] sm:$0xf]
    %v102 = vld [vmem:[%s1 + $0xa8] sm:$0xf]
    %v103 = vld [vmem:[%s1 + $0xac] sm:$0xf]
    %v104 = vld [vmem:[%s1 + $0xb0] sm:$0xf]
    %v105 = vld [vmem:[%s1 + $0xb4] sm:$0xf]
    %v106 = vld [vmem:[%s1 + $0xb8] sm:$0xf]
    %v107 = vld [vmem:[%s1 + $0xbc] sm:$0xf]
    %v108 = vld [vmem:[%s1 + $0xc0] sm:$0xf]
    %v109 = vld [vmem:[%s1 + $0xc4] sm:$0xf]
    %v110 = vld [vmem:[%s1 + $0xc8] sm:$0xf]
    %v111 = vld [vmem:[%s1 + $0xcc] sm:$0xf]
    %v112 = vld [vmem:[%s1 + $0xd0] sm:$0xf]
    %v113 = vld [vmem:[%s1 + $0xd4] sm:$0xf]
    %v114 = vld [vmem:[%s1 + $0xd8] sm:$0xf]
    %v115 = vld [vmem:[%s1 + $0xdc] sm:$0xf]
    %v116 = vld [vmem:[%s1 + $0xe0] sm:$0xf]
    %v117 = vld [vmem:[%s1 + $0xe4] sm:$0xf]
    %v118 = vld [vmem:[%s1 + $0xe8] sm:$0xf]
    %v119 = vld [vmem:[%s1 + $0xec] sm:$0xf]
    %v120 = vld [vmem:[%s1 + $0xf0] sm:$0xf]
    %v121 = vld [vmem:[%s1 + $0xf4] sm:$0xf]
    %v122 = vld [vmem:[%s1 + $0xf8] sm:$0xf]
    %v123 = vld [vmem:[%s1 + $0xfc] sm:$0xf]
    %v124 = vld [vmem:[%s1 + $0x100] sm:$0xf]
    %v125 = vld [vmem:[%s1 + $0x104] sm:$0xf]
    %v126 = vld [vmem:[%s1 + $0x108] sm:$0xf]
    %v127 = vld [vmem:[%s1 + $0x10c] sm:$0xf]
    %v128 = vld [vmem:[%s1 + $0x110] sm:$0xf]
    %v129 = vld [vmem:[%s1 + $0x114] sm:$0xf]
    %v130 = vld [vmem:[%s1 + $0x118] sm:$0xf]
    %v131 = vld [vmem:[%s1 + $0x11c] sm:$0xf]
    %v132 = vld [vmem:[%s1 + $0x120] sm:$0xf]
    %v133 = vld [vmem:[%s1 + $0x124] sm:$0xf]
    %v134 = vld [vmem:[%s1 + $0x128] sm:$0xf]
    %v135 = vld [vmem:[%s1 + $0x12c] sm:$0xf]
    %v136 = vld [vmem:[%s1 + $0x130] sm:$0xf]
    %v137 = vld [vmem:[%s1 + $0x134] sm:$0xf]
    %v138 = vld [vmem:[%s1 + $0x138] sm:$0xf]
    %v139 = vld [vmem:[%s1 + $0x13c] sm:$0xf]
    %v140 = vld [vmem:[%s1 + $0x140] sm:$0xf]
    %v141 = vld [vmem:[%s1 + $0x144] sm:$0xf]
    %v142 = vld [vmem:[%s1 + $0x148] sm:$0xf]
    %v143 = vld [vmem:[%s1 + $0x14c] sm:$0xf]
    %v144 = vld [vmem:[%s1 + $0x150] sm:$0xf]
    %v145 = vld [vmem:[%s1 + $0x154] sm:$0xf]
    %v146 = vld [vmem:[%s1 + $0x158] sm:$0xf]
    %v147 = vld [vmem:[%s1 + $0x15c] sm:$0xf]
    %v148 = vld [vmem:[%s1 + $0x160] sm:$0xf]
    %v149 = vld [vmem:[%s1 + $0x164] sm:$0xf]
    %v150 = vld [vmem:[%s1 + $0x168] sm:$0xf]
    %v151 = vld [vmem:[%s1 + $0x16c] sm:$0xf]
    %v152 = vld [vmem:[%s1 + $0x170] sm:$0xf]
    %v153 = vld [vmem:[%s1 + $0x174] sm:$0xf]
    %v154 = vld [vmem:[%s1 + $0x178] sm:$0xf]
    %v155 = vld [vmem:[%s1 + $0x17c] sm:$0xf]
    %v156 = vld [vmem:[%s1 + $0x180] sm:$0xf]
    %v157 = vld [vmem:[%s1 + $0x184] sm:$0xf]
    %v158 = vld [vmem:[%s1 + $0x188] sm:$0xf]
    %v159 = vld [vmem:[%s1 + $0x18c] sm:$0xf]
    %v160 = vld [vmem:[%s1 + $0x190] sm:$0xf]
    %v161 = vld [vmem:[%s1 + $0x194] sm:$0xf]
    %v162 = vld [vmem:[%s1 + $0x198] sm:$0xf]
    %v163 = vld [vmem:[%s1 + $0x19c] sm:$0xf]
    %v164 = vld [vmem:[%s1 + $0x1a0] sm:$0xf]
    %v165 = vld [vmem:[%s1 + $0x1a4] sm:$0xf]
    %v166 = vld [vmem:[%s1 + $0x1a8] sm:$0xf]
    %v167 = vld [vmem:[%s1 + $0x1ac] sm:$0xf]
    %v168 = vld [vmem:[%s1 + $0x1b0] sm:$0xf]
    %v169 = vld [vmem:[%s1 + $0x1b4] sm:$0xf]
    %v170 = vld [vmem:[%s1 + $0x1b8] sm:$0xf]
    %v171 = vld [vmem:[%s1 + $0x1bc] sm:$0xf]
    %v172 = vld [vmem:[%s1 + $0x1c0] sm:$0xf]
    %v173 = vld [vmem:[%s1 + $0x1c4] sm:$0xf]
    %v174 = vld [vmem:[%s1 + $0x1c8] sm:$0xf]
    %v175 = vld [vmem:[%s1 + $0x1cc] sm:$0xf]
    %v176 = vld [vmem:[%s1 + $0x1d0] sm:$0xf]
    %v177 = vld [vmem:[%s1 + $0x1d4] sm:$0xf]
    %v178 = vld [vmem:[%s1 + $0x1d8] sm:$0xf]
    %v179 = vld [vmem:[%s1 + $0x1dc] sm:$0xf]
    %v180 = vld [vmem:[%s1 + $0x1e0] sm:$0xf]
    %v181 = vld [vmem:[%s1 + $0x1e4] sm:$0xf]
    %v182 = vld [vmem:[%s1 + $0x1e8] sm:$0xf]
    %v183 = vld [vmem:[%s1 + $0x1ec] sm:$0xf]
    %v184 = vld [vmem:[%s1 + $0x1f0] sm:$0xf]
    %v185 = vld [vmem:[%s1 + $0x1f4] sm:$0xf]
    %v186 = vld [vmem:[%s1 + $0x1f8] sm:$0xf]
    %v187 = vld [vmem:[%s1 + $0x1fc] sm:$0xf]
    %v188 = vld [vmem:[%s2] sm:$0x1]
    %v190 = vlaneseq
    %v191 = vshrl.u32 %v190, 7
    %v192 = vsub.s32 0, %v191
    %v193 = vrot.slane %v188, %v192
    %v323 = vunpack.c.l.b16 %v60
    %v324 = vunpack.c.l.b16 %v61
    %v325 = vunpack.c.l.b16 %v62
    %v326 = vunpack.c.l.b16 %v63
    %v327 = vunpack.c.l.b16 %v64
    %v328 = vunpack.c.l.b16 %v65
    %v329 = vunpack.c.l.b16 %v66
    %v330 = vunpack.c.l.b16 %v67
    %v331 = vunpack.c.l.b16 %v68
    %v332 = vunpack.c.l.b16 %v69
    %v333 = vunpack.c.l.b16 %v70
    %v334 = vunpack.c.l.b16 %v71
    %v335 = vunpack.c.l.b16 %v72
    %v336 = vunpack.c.l.b16 %v73
    %v337 = vunpack.c.l.b16 %v74
    %v338 = vunpack.c.l.b16 %v75
    %v339 = vunpack.c.l.b16 %v76
    %v340 = vunpack.c.l.b16 %v77
    %v341 = vunpack.c.l.b16 %v78
    %v342 = vunpack.c.l.b16 %v79
    %v343 = vunpack.c.l.b16 %v80
    %v344 = vunpack.c.l.b16 %v81
    %v345 = vunpack.c.l.b16 %v82
    %v346 = vunpack.c.l.b16 %v83
    %v347 = vunpack.c.l.b16 %v84
    %v348 = vunpack.c.l.b16 %v85
    %v349 = vunpack.c.l.b16 %v86
    %v350 = vunpack.c.l.b16 %v87
    %v351 = vunpack.c.l.b16 %v88
    %v352 = vunpack.c.l.b16 %v89
    %v353 = vunpack.c.l.b16 %v90
    %v354 = vunpack.c.l.b16 %v91
    %v355 = vunpack.c.l.b16 %v92
    %v356 = vunpack.c.l.b16 %v93
    %v357 = vunpack.c.l.b16 %v94
    %v358 = vunpack.c.l.b16 %v95
    %v359 = vunpack.c.l.b16 %v96
    %v360 = vunpack.c.l.b16 %v97
    %v361 = vunpack.c.l.b16 %v98
    %v362 = vunpack.c.l.b16 %v99
    %v363 = vunpack.c.l.b16 %v100
    %v364 = vunpack.c.l.b16 %v101
    %v365 = vunpack.c.l.b16 %v102
    %v366 = vunpack.c.l.b16 %v103
    %v367 = vunpack.c.l.b16 %v104
    %v368 = vunpack.c.l.b16 %v105
    %v369 = vunpack.c.l.b16 %v106
    %v370 = vunpack.c.l.b16 %v107
    %v371 = vunpack.c.l.b16 %v108
    %v372 = vunpack.c.l.b16 %v109
    %v373 = vunpack.c.l.b16 %v110
    %v374 = vunpack.c.l.b16 %v111
    %v375 = vunpack.c.l.b16 %v112
    %v376 = vunpack.c.l.b16 %v113
    %v377 = vunpack.c.l.b16 %v114
    %v378 = vunpack.c.l.b16 %v115
    %v379 = vunpack.c.l.b16 %v116
    %v380 = vunpack.c.l.b16 %v117
    %v381 = vunpack.c.l.b16 %v118
    %v382 = vunpack.c.l.b16 %v119
    %v383 = vunpack.c.l.b16 %v120
    %v384 = vunpack.c.l.b16 %v121
    %v385 = vunpack.c.l.b16 %v122
    %v386 = vunpack.c.l.b16 %v123
    %v387 = vunpack.c.l.b16 %v124
    %v388 = vunpack.c.l.b16 %v125
    %v389 = vunpack.c.l.b16 %v126
    %v390 = vunpack.c.l.b16 %v127
    %v391 = vunpack.c.l.b16 %v128
    %v392 = vunpack.c.l.b16 %v129
    %v393 = vunpack.c.l.b16 %v130
    %v394 = vunpack.c.l.b16 %v131
    %v395 = vunpack.c.l.b16 %v132
    %v396 = vunpack.c.l.b16 %v133
    %v397 = vunpack.c.l.b16 %v134
    %v398 = vunpack.c.l.b16 %v135
    %v399 = vunpack.c.l.b16 %v136
    %v400 = vunpack.c.l.b16 %v137
    %v401 = vunpack.c.l.b16 %v138
    %v402 = vunpack.c.l.b16 %v139
    %v403 = vunpack.c.l.b16 %v140
    %v404 = vunpack.c.l.b16 %v141
    %v405 = vunpack.c.l.b16 %v142
    %v406 = vunpack.c.l.b16 %v143
    %v407 = vunpack.c.l.b16 %v144
    %v408 = vunpack.c.l.b16 %v145
    %v409 = vunpack.c.l.b16 %v146
    %v410 = vunpack.c.l.b16 %v147
    %v411 = vunpack.c.l.b16 %v148
    %v412 = vunpack.c.l.b16 %v149
    %v413 = vunpack.c.l.b16 %v150
    %v414 = vunpack.c.l.b16 %v151
    %v415 = vunpack.c.l.b16 %v152
    %v416 = vunpack.c.l.b16 %v153
    %v417 = vunpack.c.l.b16 %v154
    %v418 = vunpack.c.l.b16 %v155
    %v419 = vunpack.c.l.b16 %v156
    %v420 = vunpack.c.l.b16 %v157
    %v421 = vunpack.c.l.b16 %v158
    %v422 = vunpack.c.l.b16 %v159
    %v423 = vunpack.c.l.b16 %v160
    %v424 = vunpack.c.l.b16 %v161
    %v425 = vunpack.c.l.b16 %v162
    %v426 = vunpack.c.l.b16 %v163
    %v427 = vunpack.c.l.b16 %v164
    %v428 = vunpack.c.l.b16 %v165
    %v429 = vunpack.c.l.b16 %v166
    %v430 = vunpack.c.l.b16 %v167
    %v431 = vunpack.c.l.b16 %v168
    %v432 = vunpack.c.l.b16 %v169
    %v433 = vunpack.c.l.b16 %v170
    %v434 = vunpack.c.l.b16 %v171
    %v435 = vunpack.c.l.b16 %v172
    %v436 = vunpack.c.l.b16 %v173
    %v437 = vunpack.c.l.b16 %v174
    %v438 = vunpack.c.l.b16 %v175
    %v439 = vunpack.c.l.b16 %v176
    %v440 = vunpack.c.l.b16 %v177
    %v441 = vunpack.c.l.b16 %v178
    %v442 = vunpack.c.l.b16 %v179
    %v443 = vunpack.c.l.b16 %v180
    %v444 = vunpack.c.l.b16 %v181
    %v445 = vunpack.c.l.b16 %v182
    %v446 = vunpack.c.l.b16 %v183
    %v447 = vunpack.c.l.b16 %v184
    %v448 = vunpack.c.l.b16 %v185
    %v449 = vunpack.c.l.b16 %v186
    %v450 = vunpack.c.l.b16 %v187
    %v451 = vpack.c.b16 %v324, %v323
    %v452 = vpack.c.b16 %v326, %v325
    %v453 = vpack.c.b16 %v328, %v327
    %v454 = vpack.c.b16 %v330, %v329
    %v455 = vpack.c.b16 %v332, %v331
    %v456 = vpack.c.b16 %v334, %v333
    %v457 = vpack.c.b16 %v336, %v335
    %v458 = vpack.c.b16 %v338, %v337
    %v459 = vpack.c.b16 %v340, %v339
    %v460 = vpack.c.b16 %v342, %v341
    %v461 = vpack.c.b16 %v344, %v343
    %v462 = vpack.c.b16 %v346, %v345
    %v463 = vpack.c.b16 %v348, %v347
    %v464 = vpack.c.b16 %v350, %v349
    %v465 = vpack.c.b16 %v352, %v351
    %v466 = vpack.c.b16 %v354, %v353
    %v467 = vpack.c.b16 %v356, %v355
    %v468 = vpack.c.b16 %v358, %v357
    %v469 = vpack.c.b16 %v360, %v359
    %v470 = vpack.c.b16 %v362, %v361
    %v471 = vpack.c.b16 %v364, %v363
    %v472 = vpack.c.b16 %v366, %v365
    %v473 = vpack.c.b16 %v368, %v367
    %v474 = vpack.c.b16 %v370, %v369
    %v475 = vpack.c.b16 %v372, %v371
    %v476 = vpack.c.b16 %v374, %v373
    %v477 = vpack.c.b16 %v376, %v375
    %v478 = vpack.c.b16 %v378, %v377
    %v479 = vpack.c.b16 %v380, %v379
    %v480 = vpack.c.b16 %v382, %v381
    %v481 = vpack.c.b16 %v384, %v383
    %v482 = vpack.c.b16 %v386, %v385
    %v483 = vpack.c.b16 %v388, %v387
    %v484 = vpack.c.b16 %v390, %v389
    %v485 = vpack.c.b16 %v392, %v391
    %v486 = vpack.c.b16 %v394, %v393
    %v487 = vpack.c.b16 %v396, %v395
    %v488 = vpack.c.b16 %v398, %v397
    %v489 = vpack.c.b16 %v400, %v399
    %v490 = vpack.c.b16 %v402, %v401
    %v491 = vpack.c.b16 %v404, %v403
    %v492 = vpack.c.b16 %v406, %v405
    %v493 = vpack.c.b16 %v408, %v407
    %v494 = vpack.c.b16 %v410, %v409
    %v495 = vpack.c.b16 %v412, %v411
    %v496 = vpack.c.b16 %v414, %v413
    %v497 = vpack.c.b16 %v416, %v415
    %v498 = vpack.c.b16 %v418, %v417
    %v499 = vpack.c.b16 %v420, %v419
    %v500 = vpack.c.b16 %v422, %v421
    %v501 = vpack.c.b16 %v424, %v423
    %v502 = vpack.c.b16 %v426, %v425
    %v503 = vpack.c.b16 %v428, %v427
    %v504 = vpack.c.b16 %v430, %v429
    %v505 = vpack.c.b16 %v432, %v431
    %v506 = vpack.c.b16 %v434, %v433
    %v507 = vpack.c.b16 %v436, %v435
    %v508 = vpack.c.b16 %v438, %v437
    %v509 = vpack.c.b16 %v440, %v439
    %v510 = vpack.c.b16 %v442, %v441
    %v511 = vpack.c.b16 %v444, %v443
    %v512 = vpack.c.b16 %v446, %v445
    %v513 = vpack.c.b16 %v448, %v447
    %v514 = vpack.c.b16 %v450, %v449
    %579 = vmatprep.subr.bf16.mxu0 0
    %580 = vmatpush1.bf16.msra.mxu0 %v451
    %581 = vmatprep.subr.bf16.mxu0 0
    %582 = vmatpush1.bf16.msra.mxu0 %v452
    %583 = vmatprep.subr.bf16.mxu0 0
    %584 = vmatpush1.bf16.msra.mxu0 %v453
    %585 = vmatprep.subr.bf16.mxu0 0
    %586 = vmatpush1.bf16.msra.mxu0 %v454
    %587 = vmatprep.subr.bf16.mxu0 0
    %588 = vmatpush1.bf16.msra.mxu0 %v455
    %589 = vmatprep.subr.bf16.mxu0 0
    %590 = vmatpush1.bf16.msra.mxu0 %v456
    %591 = vmatprep.subr.bf16.mxu0 0
    %592 = vmatpush1.bf16.msra.mxu0 %v457
    %593 = vmatprep.subr.bf16.mxu0 0
    %594 = vmatpush1.bf16.msra.mxu0 %v458
    %595 = vmatprep.subr.bf16.mxu0 0
    %596 = vmatpush1.bf16.msra.mxu0 %v459
    %597 = vmatprep.subr.bf16.mxu0 0
    %598 = vmatpush1.bf16.msra.mxu0 %v460
    %599 = vmatprep.subr.bf16.mxu0 0
    %600 = vmatpush1.bf16.msra.mxu0 %v461
    %601 = vmatprep.subr.bf16.mxu0 0
    %602 = vmatpush1.bf16.msra.mxu0 %v462
    %603 = vmatprep.subr.bf16.mxu0 0
    %604 = vmatpush1.bf16.msra.mxu0 %v463
    %605 = vmatprep.subr.bf16.mxu0 0
    %606 = vmatpush1.bf16.msra.mxu0 %v464
    %607 = vmatprep.subr.bf16.mxu0 0
    %608 = vmatpush1.bf16.msra.mxu0 %v465
    %609 = vmatprep.subr.bf16.mxu0 0
    %610 = vmatpush1.bf16.msra.mxu0 %v466
    %611 = vmatprep.mubr.bf16.mxu0 %v53
    %612 = vmatmul.mubr.bf16.gmra.mrb[0].mxu0 %v52
    %v613 = vpop.f32.mrb[0].mxu0
    %v614 = vadd.f32 %v193, %v613
    %v615 = vpop.f32.mrb[0].mxu0
    %v616 = vpop.f32.mrb[0].mxu0
    %v617 = vadd.f32 %v193, %v616
    %v618 = vpop.f32.mrb[0].mxu0
    %619 = vdwg.mxu0
    %620 = vmatprep.subr.bf16.mxu0 0
    %621 = vmatpush1.bf16.msra.mxu0 %v467
    %622 = vmatprep.subr.bf16.mxu0 0
    %623 = vmatpush1.bf16.msra.mxu0 %v468
    %624 = vmatprep.subr.bf16.mxu0 0
    %625 = vmatpush1.bf16.msra.mxu0 %v469
    %626 = vmatprep.subr.bf16.mxu0 0
    %627 = vmatpush1.bf16.msra.mxu0 %v470
    %628 = vmatprep.subr.bf16.mxu0 0
    %629 = vmatpush1.bf16.msra.mxu0 %v471
    %630 = vmatprep.subr.bf16.mxu0 0
    %631 = vmatpush1.bf16.msra.mxu0 %v472
    %632 = vmatprep.subr.bf16.mxu0 0
    %633 = vmatpush1.bf16.msra.mxu0 %v473
    %634 = vmatprep.subr.bf16.mxu0 0
    %635 = vmatpush1.bf16.msra.mxu0 %v474
    %636 = vmatprep.subr.bf16.mxu0 0
    %637 = vmatpush1.bf16.msra.mxu0 %v475
    %638 = vmatprep.subr.bf16.mxu0 0
    %639 = vmatpush1.bf16.msra.mxu0 %v476
    %640 = vmatprep.subr.bf16.mxu0 0
    %641 = vmatpush1.bf16.msra.mxu0 %v477
    %642 = vmatprep.subr.bf16.mxu0 0
    %643 = vmatpush1.bf16.msra.mxu0 %v478
    %644 = vmatprep.subr.bf16.mxu0 0
    %645 = vmatpush1.bf16.msra.mxu0 %v479
    %646 = vmatprep.subr.bf16.mxu0 0
    %647 = vmatpush1.bf16.msra.mxu0 %v480
    %648 = vmatprep.subr.bf16.mxu0 0
    %649 = vmatpush1.bf16.msra.mxu0 %v481
    %650 = vmatprep.subr.bf16.mxu0 0
    %651 = vmatpush1.bf16.msra.mxu0 %v482
    %652 = vmatprep.mubr.bf16.mxu0 %v55
    %653 = vmatmul.mubr.bf16.gmra.mrb[0].mxu0 %v54
    %v654 = vpop.f32.mrb[0].mxu0
    %v655 = vadd.f32 %v614, %v654
    %v656 = vpop.f32.mrb[0].mxu0
    %v657 = vpop.f32.mrb[0].mxu0
    %v658 = vadd.f32 %v617, %v657
    %v659 = vpop.f32.mrb[0].mxu0
    %660 = vdwg.mxu0
    %661 = vmatprep.subr.bf16.mxu0 0
    %662 = vmatpush1.bf16.msra.mxu0 %v483
    %663 = vmatprep.subr.bf16.mxu0 0
    %664 = vmatpush1.bf16.msra.mxu0 %v484
    %665 = vmatprep.subr.bf16.mxu0 0
    %666 = vmatpush1.bf16.msra.mxu0 %v485
    %667 = vmatprep.subr.bf16.mxu0 0
    %668 = vmatpush1.bf16.msra.mxu0 %v486
    %669 = vmatprep.subr.bf16.mxu0 0
    %670 = vmatpush1.bf16.msra.mxu0 %v487
    %671 = vmatprep.subr.bf16.mxu0 0
    %672 = vmatpush1.bf16.msra.mxu0 %v488
    %673 = vmatprep.subr.bf16.mxu0 0
    %674 = vmatpush1.bf16.msra.mxu0 %v489
    %675 = vmatprep.subr.bf16.mxu0 0
    %676 = vmatpush1.bf16.msra.mxu0 %v490
    %677 = vmatprep.subr.bf16.mxu0 0
    %678 = vmatpush1.bf16.msra.mxu0 %v491
    %679 = vmatprep.subr.bf16.mxu0 0
    %680 = vmatpush1.bf16.msra.mxu0 %v492
    %681 = vmatprep.subr.bf16.mxu0 0
    %682 = vmatpush1.bf16.msra.mxu0 %v493
    %683 = vmatprep.subr.bf16.mxu0 0
    %684 = vmatpush1.bf16.msra.mxu0 %v494
    %685 = vmatprep.subr.bf16.mxu0 0
    %686 = vmatpush1.bf16.msra.mxu0 %v495
    %687 = vmatprep.subr.bf16.mxu0 0
    %688 = vmatpush1.bf16.msra.mxu0 %v496
    %689 = vmatprep.subr.bf16.mxu0 0
    %690 = vmatpush1.bf16.msra.mxu0 %v497
    %691 = vmatprep.subr.bf16.mxu0 0
    %692 = vmatpush1.bf16.msra.mxu0 %v498
    %693 = vmatprep.mubr.bf16.mxu0 %v57
    %694 = vmatmul.mubr.bf16.gmra.mrb[0].mxu0 %v56
    %v695 = vpop.f32.mrb[0].mxu0
    %v696 = vadd.f32 %v655, %v695
    %v697 = vpop.f32.mrb[0].mxu0
    %v698 = vpop.f32.mrb[0].mxu0
    %v699 = vadd.f32 %v658, %v698
    %v700 = vpop.f32.mrb[0].mxu0
    %701 = vdwg.mxu0
    %702 = vmatprep.subr.bf16.mxu0 0
    %703 = vmatpush1.bf16.msra.mxu0 %v499
    %704 = vmatprep.subr.bf16.mxu0 0
    %705 = vmatpush1.bf16.msra.mxu0 %v500
    %706 = vmatprep.subr.bf16.mxu0 0
    %707 = vmatpush1.bf16.msra.mxu0 %v501
    %708 = vmatprep.subr.bf16.mxu0 0
    %709 = vmatpush1.bf16.msra.mxu0 %v502
    %710 = vmatprep.subr.bf16.mxu0 0
    %711 = vmatpush1.bf16.msra.mxu0 %v503
    %712 = vmatprep.subr.bf16.mxu0 0
    %713 = vmatpush1.bf16.msra.mxu0 %v504
    %714 = vmatprep.subr.bf16.mxu0 0
    %715 = vmatpush1.bf16.msra.mxu0 %v505
    %716 = vmatprep.subr.bf16.mxu0 0
    %717 = vmatpush1.bf16.msra.mxu0 %v506
    %718 = vmatprep.subr.bf16.mxu0 0
    %719 = vmatpush1.bf16.msra.mxu0 %v507
    %720 = vmatprep.subr.bf16.mxu0 0
    %721 = vmatpush1.bf16.msra.mxu0 %v508
    %722 = vmatprep.subr.bf16.mxu0 0
    %723 = vmatpush1.bf16.msra.mxu0 %v509
    %724 = vmatprep.subr.bf16.mxu0 0
    %725 = vmatpush1.bf16.msra.mxu0 %v510
    %726 = vmatprep.subr.bf16.mxu0 0
    %727 = vmatpush1.bf16.msra.mxu0 %v511
    %728 = vmatprep.subr.bf16.mxu0 0
    %729 = vmatpush1.bf16.msra.mxu0 %v512
    %730 = vmatprep.subr.bf16.mxu0 0
    %731 = vmatpush1.bf16.msra.mxu0 %v513
    %732 = vmatprep.subr.bf16.mxu0 0
    %733 = vmatpush1.bf16.msra.mxu0 %v514
    %734 = vmatprep.mubr.bf16.mxu0 %v59
    %735 = vmatmul.mubr.bf16.gmra.mrb[0].mxu0 %v58
    %v736 = vpop.f32.mrb[0].mxu0
    %v737 = vadd.f32 %v696, %v736
    %v738 = vpop.f32.mrb[0].mxu0
    %v739 = vpop.f32.mrb[0].mxu0
    %v740 = vadd.f32 %v699, %v739
    %v741 = vpop.f32.mrb[0].mxu0
    %742 = vdwg.mxu0
    %v743 = vmul.f32 %v737, 0.01
    %v744 = vmul.f32 %v740, 0.01
    %v745 = vmax.f32 %v737, %v743
    %v746 = vmax.f32 %v740, %v744
    %v747 = vpack.c.bf16 %v746, %v745
    %v748 = vld [vmem:[%s3] sm:$0xf]
    %v749 = vld [vmem:[%s3 + $0x4] sm:$0xf]
    %v750 = vld [vmem:[%s3 + $0x8] sm:$0xf]
    %v751 = vld [vmem:[%s3 + $0xc] sm:$0xf]
    %v752 = vld [vmem:[%s4] sm:$0x1]
    %v754 = vlaneseq
    %v755 = vshrl.u32 %v754, 7
    %v756 = vsub.s32 0, %v755
    %v757 = vrot.slane %v752, %v756
    %v763 = vunpack.c.l.b16 %v748
    %v764 = vunpack.c.l.b16 %v749
    %v765 = vunpack.c.l.b16 %v750
    %v766 = vunpack.c.l.b16 %v751
    %v767 = vpack.c.b16 %v764, %v763
    %v768 = vpack.c.b16 %v766, %v765
    %vm771 = vcmask 261120
    %v773 = vsel %vm771, %v747, 0
    %775 = vmatprep.subr.bf16.mxu0 0
    %776 = vmatpush1.bf16.msra.mxu0 %v767
    %777 = vmatprep.subr.bf16.mxu0 0
    %778 = vmatpush1.bf16.msra.mxu0 %v768
    %779 = vmatprep.subr.bf16.mxu0 0
    %780 = vmatpush1.bf16.msra.mxu0 0
    %781 = vmatprep.subr.bf16.mxu0 0
    %782 = vmatpush1.bf16.msra.mxu0 0
    %783 = vmatprep.subr.bf16.mxu0 0
    %784 = vmatpush1.bf16.msra.mxu0 0
    %785 = vmatprep.subr.bf16.mxu0 0
    %786 = vmatpush1.bf16.msra.mxu0 0
    %787 = vmatprep.subr.bf16.mxu0 0
    %788 = vmatpush1.bf16.msra.mxu0 0
    %789 = vmatprep.subr.bf16.mxu0 0
    %790 = vmatpush1.bf16.msra.mxu0 0
    %791 = vmatprep.subr.bf16.mxu0 0
    %792 = vmatpush1.bf16.msra.mxu0 0
    %793 = vmatprep.subr.bf16.mxu0 0
    %794 = vmatpush1.bf16.msra.mxu0 0
    %795 = vmatprep.subr.bf16.mxu0 0
    %796 = vmatpush1.bf16.msra.mxu0 0
    %797 = vmatprep.subr.bf16.mxu0 0
    %798 = vmatpush1.bf16.msra.mxu0 0
    %799 = vmatprep.subr.bf16.mxu0 0
    %800 = vmatpush1.bf16.msra.mxu0 0
    %801 = vmatprep.subr.bf16.mxu0 0
    %802 = vmatpush1.bf16.msra.mxu0 0
    %803 = vmatprep.subr.bf16.mxu0 0
    %804 = vmatpush1.bf16.msra.mxu0 0
    %805 = vmatprep.subr.bf16.mxu0 0
    %806 = vmatpush1.bf16.msra.mxu0 0
    %807 = vmatprep.mubr.bf16.mxu0 0
    %808 = vmatmul.mubr.bf16.gmra.mrb[0].mxu0 %v773
    %v809 = vpop.f32.mrb[0].mxu0
    %v810 = vadd.f32 %v757, %v809
    %v811 = vpop.f32.mrb[0].mxu0
    %v812 = vpop.f32.mrb[0].mxu0
    %v813 = vadd.f32 %v757, %v812
    %v814 = vpop.f32.mrb[0].mxu0
    %815 = vdwg.mxu0
    %v816 = vmul.f32 %v810, 0.01
    %v817 = vmul.f32 %v813, 0.01
    %v818 = vmax.f32 %v810, %v816
    %v819 = vmax.f32 %v813, %v817
    %v820 = vpack.c.bf16 %v819, %v818
    %v821 = vld [vmem:[%s5] sm:$0xf]
    %v822 = vld [vmem:[%s5 + $0x4] sm:$0xf]
    %v823 = vld [vmem:[%s5 + $0x8] sm:$0xf]
    %v824 = vld [vmem:[%s5 + $0xc] sm:$0xf]
    %v825 = vld [vmem:[%s6] sm:$0x1]
    %v827 = vlaneseq
    %v828 = vshrl.u32 %v827, 7
    %v829 = vsub.s32 0, %v828
    %v830 = vrot.slane %v825, %v829
    %v836 = vunpack.c.l.b16 %v821
    %v837 = vunpack.c.l.b16 %v822
    %v838 = vunpack.c.l.b16 %v823
    %v839 = vunpack.c.l.b16 %v824
    %v840 = vpack.c.b16 %v837, %v836
    %v841 = vpack.c.b16 %v839, %v838
    %v845 = vsel %vm771, %v820, 0
    %847 = vmatprep.subr.bf16.mxu0 0
    %848 = vmatpush1.bf16.msra.mxu0 %v840
    %849 = vmatprep.subr.bf16.mxu0 0
    %850 = vmatpush1.bf16.msra.mxu0 %v841
    %851 = vmatprep.subr.bf16.mxu0 0
    %852 = vmatpush1.bf16.msra.mxu0 0
    %853 = vmatprep.subr.bf16.mxu0 0
    %854 = vmatpush1.bf16.msra.mxu0 0
    %855 = vmatprep.subr.bf16.mxu0 0
    %856 = vmatpush1.bf16.msra.mxu0 0
    %857 = vmatprep.subr.bf16.mxu0 0
    %858 = vmatpush1.bf16.msra.mxu0 0
    %859 = vmatprep.subr.bf16.mxu0 0
    %860 = vmatpush1.bf16.msra.mxu0 0
    %861 = vmatprep.subr.bf16.mxu0 0
    %862 = vmatpush1.bf16.msra.mxu0 0
    %863 = vmatprep.subr.bf16.mxu0 0
    %864 = vmatpush1.bf16.msra.mxu0 0
    %865 = vmatprep.subr.bf16.mxu0 0
    %866 = vmatpush1.bf16.msra.mxu0 0
    %867 = vmatprep.subr.bf16.mxu0 0
    %868 = vmatpush1.bf16.msra.mxu0 0
    %869 = vmatprep.subr.bf16.mxu0 0
    %870 = vmatpush1.bf16.msra.mxu0 0
    %871 = vmatprep.subr.bf16.mxu0 0
    %872 = vmatpush1.bf16.msra.mxu0 0
    %873 = vmatprep.subr.bf16.mxu0 0
    %874 = vmatpush1.bf16.msra.mxu0 0
    %875 = vmatprep.subr.bf16.mxu0 0
    %876 = vmatpush1.bf16.msra.mxu0 0
    %877 = vmatprep.subr.bf16.mxu0 0
    %878 = vmatpush1.bf16.msra.mxu0 0
    %879 = vmatprep.mubr.bf16.mxu0 0
    %880 = vmatmul.mubr.bf16.gmra.mrb[0].mxu0 %v845
    %v881 = vpop.f32.mrb[0].mxu0
    %v882 = vadd.f32 %v830, %v881
    %v883 = vpop.f32.mrb[0].mxu0
    %v884 = vpop.f32.mrb[0].mxu0
    %v885 = vadd.f32 %v830, %v884
    %v886 = vpop.f32.mrb[0].mxu0
    %887 = vdwg.mxu0
    %v888 = vmul.f32 %v882, 0.01
    %v889 = vmul.f32 %v885, 0.01
    %v890 = vmax.f32 %v882, %v888
    %v891 = vmax.f32 %v885, %v889
    %v892 = vld [vmem:[%s7] sm:$0x1]
    %v893 = vld [vmem:[#allocation2] sm:$0x1]
    %895 = vset.pattern.permute.xlu0 0
    %896 = vperm.xlu0 %895, %v893
    %v897 = vpop.permute.xlu0 %896
    %v899 = vlaneseq
    %v900 = vshrl.u32 %v899, 7
    %v901 = vsub.s32 0, %v900
    %v902 = vrot.slane %v897, %v901
    %v904 = vsel %vm771, %v892, 0
    %v907 = vsel %vm771, %v890, 0
    %v910 = vsel %vm771, %v891, 0
    %912 = vmatprep.subr.mxu0 0.0
    %913 = vmatpush1.xpose.msra.mxu0 %v907
    %914 = vmatprep.subr.mxu0 0.0
    %915 = vmatpush1.xpose.msra.mxu0 %v910
    %916 = vmatprep.subr.mxu0 0.0
    %917 = vmatpush1.xpose.msra.mxu0 0.0
    %918 = vmatprep.subr.mxu0 0.0
    %919 = vmatpush1.xpose.msra.mxu0 0.0
    %920 = vmatprep.subr.mxu0 0.0
    %921 = vmatpush1.xpose.msra.mxu0 0.0
    %922 = vmatprep.subr.mxu0 0.0
    %923 = vmatpush1.xpose.msra.mxu0 0.0
    %924 = vmatprep.subr.mxu0 0.0
    %925 = vmatpush1.xpose.msra.mxu0 0.0
    %926 = vmatprep.subr.mxu0 0.0
    %927 = vmatpush1.xpose.msra.mxu0 0.0
    %928 = vmatprep.subr.mxu0 0.0
    %929 = vmatpush1.xpose.msra.mxu0 0.0
    %930 = vmatprep.subr.mxu0 0.0
    %931 = vmatpush1.xpose.msra.mxu0 0.0
    %932 = vmatprep.subr.mxu0 0.0
    %933 = vmatpush1.xpose.msra.mxu0 0.0
    %934 = vmatprep.subr.mxu0 0.0
    %935 = vmatpush1.xpose.msra.mxu0 0.0
    %936 = vmatprep.subr.mxu0 0.0
    %937 = vmatpush1.xpose.msra.mxu0 0.0
    %938 = vmatprep.subr.mxu0 0.0
    %939 = vmatpush1.xpose.msra.mxu0 0.0
    %940 = vmatprep.subr.mxu0 0.0
    %941 = vmatpush1.xpose.msra.mxu0 0.0
    %942 = vmatprep.subr.mxu0 0.0
    %943 = vmatpush1.xpose.msra.mxu0 0.0
    %944 = vmatprep.subr.mxu0 0.0
    %945 = vmatpush1.xpose.msra.mxu0 0.0
    %946 = vmatprep.subr.mxu0 0.0
    %947 = vmatpush1.xpose.msra.mxu0 0.0
    %948 = vmatprep.subr.mxu0 0.0
    %949 = vmatpush1.xpose.msra.mxu0 0.0
    %950 = vmatprep.subr.mxu0 0.0
    %951 = vmatpush1.xpose.msra.mxu0 0.0
    %952 = vmatprep.subr.mxu0 0.0
    %953 = vmatpush1.xpose.msra.mxu0 0.0
    %954 = vmatprep.subr.mxu0 0.0
    %955 = vmatpush1.xpose.msra.mxu0 0.0
    %956 = vmatprep.subr.mxu0 0.0
    %957 = vmatpush1.xpose.msra.mxu0 0.0
    %958 = vmatprep.subr.mxu0 0.0
    %959 = vmatpush1.xpose.msra.mxu0 0.0
    %960 = vmatprep.subr.mxu0 0.0
    %961 = vmatpush1.xpose.msra.mxu0 0.0
    %962 = vmatprep.subr.mxu0 0.0
    %963 = vmatpush1.xpose.msra.mxu0 0.0
    %964 = vmatprep.subr.mxu0 0.0
    %965 = vmatpush1.xpose.msra.mxu0 0.0
    %966 = vmatprep.subr.mxu0 0.0
    %967 = vmatpush1.xpose.msra.mxu0 0.0
    %968 = vmatprep.subr.mxu0 0.0
    %969 = vmatpush1.xpose.msra.mxu0 0.0
    %970 = vmatprep.subr.mxu0 0.0
    %971 = vmatpush1.xpose.msra.mxu0 0.0
    %972 = vmatprep.subr.mxu0 0.0
    %973 = vmatpush1.xpose.msra.mxu0 0.0
    %974 = vmatprep.subr.mxu0 0.0
    %975 = vmatpush1.xpose.msra.mxu0 0.0
    %976 = vmatprep.mubr.f32.mxu0 0.0
    %977 = vmatmul.mubr.f32.gmra.mrb[0].mxu0 %v904
    %v978 = vpop.f32.mrb[0].mxu0
    %v979 = vadd.f32 %v902, %v978
    %v980 = vpop.f32.mrb[0].mxu0
    %981 = vdwg.mxu0
    %vm982 = vcmask 122880
    %983 = vst.msk [vmem:[#allocation3] sm:$0x1] %vm982, %v979
    // Predicated region
    $region38: #{tpu_custom_call.1} parent=1 // pred_check
      _
    $region39: #{tpu_custom_call.1} parent=1 // pred_check_branch
      %985 = sbr.rel (0) target = $region41
    $region40: #{tpu_custom_call.1} parent=1 // pred_region
      %s987 = ssub.s32 16, 16
      %988 = vsyncadd [#allocation4], %s987
      %s990 = sshll.u32 [#allocation3], 4
      %s991 = int_to_ptr.vmem [resolvable:$true] %s990
      %993 = dma.vmem_to_hbm [thread:$0]  %s991, 16, %s9, [#allocation4]
    $region41: #{tpu_custom_call.1} parent=1 // pred_fallthru
      _
    // Predicated region
    $region42: #{tpu_custom_call.1} parent=1 // pred_check
      _
    $region43: #{tpu_custom_call.1} parent=1 // pred_check_branch
      %995 = sbr.rel (0) target = $region45
    $region44: #{tpu_custom_call.1} parent=1 // pred_region
      %996 = dma.done [#allocation4], 16
    $region45: #{tpu_custom_call.1} parent=1 // pred_fallthru
      _
    %997 = vsyncpa [#allocation4], 1

</llo_original>
